<compile_context>
chip_gen: v7x
topology: tpu7x:2x2x1
jax: 0.10.0
libtpu: 0.0.40
codegen_flags: <defaults>
</compile_context>

<pallas_src>
import functools

import jax
import jax.numpy as jnp
from jax import lax
from jax.experimental import pallas as pl
from jax.experimental.pallas import tpu as pltpu

IN_FEATURES = 48
OUT_FEATURES = 16

# Batch sizes up to this stay gridless (whole problem is a few hundred KiB of
# VMEM at most); above it we tile the batch dim so VMEM is bounded on every
# generation (including v7x's 64 MiB physical / 32 MiB scoped VMEM).
_GRIDLESS_MAX_B = 1024
_BATCH_TILE = 512  # measured sweet spot (~85% of HBM roofline for mem-bound tiles)


def _linear_kernel(x_ref, wt_ref, b_ref, o_ref):
    # x: (tb, 48), wt: (48, 16) pre-transposed, b: (1, 16).
    # Canonical (M,K)@(K,N) contraction -> MXU, f32 accumulation; bias on VPU.
    acc = lax.dot_general(
        x_ref[...], wt_ref[...],
        dimension_numbers=(((1,), (0,)), ((), ())),
        preferred_element_type=jnp.float32,
    )
    o_ref[...] = acc + b_ref[...]


def _cost(batch):
    # Advisory hint: this custom call is tiny — let XLA overlap neighbors.
    return pl.CostEstimate(
        flops=2 * batch * IN_FEATURES * OUT_FEATURES,
        transcendentals=0,
        bytes_accessed=4 * (batch * IN_FEATURES
                            + IN_FEATURES * OUT_FEATURES
                            + OUT_FEATURES
                            + batch * OUT_FEATURES),
    )


@jax.jit
def linear_pallas(x1, weight_t, bias):
    """x1: (B, 48) f32; weight_t: (48, 16) f32 (pre-transposed once, outside
    the hot path); bias: (16,) f32.  Returns (B, 16) f32."""
    B = x1.shape[0]
    b2 = bias.reshape(1, OUT_FEATURES)  # traced under jit -> fused, free

    if B <= _GRIDLESS_MAX_B:
        # Single-tile problem: gridless call, whole arrays mapped into VMEM,
        # no pipeline prologue/epilogue or double-buffer DMA machinery.
        return pl.pallas_call(
            _linear_kernel,
            out_shape=jax.ShapeDtypeStruct((B, OUT_FEATURES), jnp.float32),
            in_specs=[
                pl.BlockSpec(memory_space=pltpu.MemorySpace.VMEM),
                pl.BlockSpec(memory_space=pltpu.MemorySpace.VMEM),
                pl.BlockSpec(memory_space=pltpu.MemorySpace.VMEM),
            ],
            out_specs=pl.BlockSpec(memory_space=pltpu.MemorySpace.VMEM),
            cost_estimate=_cost(B),
        )(x1, weight_t, b2)

    # Large batch: tile the batch dim so VMEM stays bounded on all generations
    # and the auto double-buffered pipeline overlaps DMA with MXU work.
    # TODO(synk): for very large B, a lane-dense (padded-to-128) output layout
    # would avoid masked vst.msk stores; kept N=16 here so callers see the
    # natural (B, 16) layout.
    tb = _BATCH_TILE
    return pl.pallas_call(
        _linear_kernel,
        out_shape=jax.ShapeDtypeStruct((B, OUT_FEATURES), jnp.float32),
        grid=(pl.cdiv(B, tb),),
        in_specs=[
            pl.BlockSpec((tb, IN_FEATURES), lambda i: (i, 0)),
            pl.BlockSpec((IN_FEATURES, OUT_FEATURES), lambda i: (0, 0)),
            pl.BlockSpec((1, OUT_FEATURES), lambda i: (0, 0)),
        ],
        out_specs=pl.BlockSpec((tb, OUT_FEATURES), lambda i: (i, 0)),
        compiler_params=pltpu.CompilerParams(
            dimension_semantics=("parallel",)),
        cost_estimate=_cost(B),
    )(x1, weight_t, b2)


def model_forward(x1, x2, weight_t, bias):
    """Mirror of Model.forward(x1, x2): x2 is ignored (see TODO at top) and is
    deliberately NOT forwarded into the jitted computation."""
    del x2
    return linear_pallas(x1, weight_t, bias)


def init_params(key):
    """nn.Linear-style init: U(-1/sqrt(in), 1/sqrt(in)).  Returns the weight in
    PyTorch layout plus its one-time transpose used by the kernel."""
    kw, kb = jax.random.split(key)
    bound = 1.0 / jnp.sqrt(float(IN_FEATURES))
    weight = jax.random.uniform(
        kw, (OUT_FEATURES, IN_FEATURES), jnp.float32, -bound, bound)
    bias = jax.random.uniform(
        kb, (OUT_FEATURES,), jnp.float32, -bound, bound)
    weight_t = jnp.asarray(weight.T)  # one-time, outside the hot path
    return weight, weight_t, bias


if __name__ == "__main__":
    key = jax.random.PRNGKey(0)
    k1, k2, kp = jax.random.split(key, 3)

    x1 = jax.random.normal(k1, (1, IN_FEATURES), jnp.float32)
    x2 = jax.random.normal(k2, (1, IN_FEATURES), jnp.float32)
    weight, weight_t, bias = init_params(kp)

    out = model_forward(x1, x2, weight_t, bias)
    out = jax.block_until_ready(out)

    # Correctness check against plain-JAX reference (x1 @ W.T + b).
    ref = x1 @ weight.T + bias
    assert out.shape == (1, OUT_FEATURES)
    assert jnp.allclose(out, ref, atol=1e-5, rtol=1e-5)

    print("KERNEL_OK")
</pallas_src>

<mosaic_0001>
module attributes {stable_mosaic.version = 11 : i64} {
  func.func @_linear_kernel(%arg0: memref<1x48xf32, #tpu.memory_space<vmem>>, %arg1: memref<48x16xf32, #tpu.memory_space<vmem>>, %arg2: memref<1x16xf32, #tpu.memory_space<vmem>>, %arg3: memref<1x16xf32, #tpu.memory_space<vmem>>) attributes {dimension_semantics = [], scalar_prefetch = 0 : i64, scratch_operands = 0 : i64, tpu.core_type = #tpu.core_type<tc>} {
    %c0 = arith.constant 0 : index
    %c0_0 = arith.constant 0 : index
    %0 = vector.load %arg0[%c0, %c0_0] : memref<1x48xf32, #tpu.memory_space<vmem>>, vector<1x48xf32>
    %c0_1 = arith.constant 0 : index
    %c0_2 = arith.constant 0 : index
    %1 = vector.load %arg1[%c0_1, %c0_2] : memref<48x16xf32, #tpu.memory_space<vmem>>, vector<48x16xf32>
    %cst = arith.constant dense<0.000000e+00> : vector<1x16xf32>
    %2 = tpu.matmul %0, %1, %cst {dimension_numbers = #tpu.dot_dimension_numbers<[1], [0], [0], [1], [0, 0, 1, 1], [], []>} : vector<1x48xf32>, vector<48x16xf32>, vector<1x16xf32> -> vector<1x16xf32>
    %c0_3 = arith.constant 0 : index
    %c0_4 = arith.constant 0 : index
    %3 = vector.load %arg2[%c0_3, %c0_4] : memref<1x16xf32, #tpu.memory_space<vmem>>, vector<1x16xf32>
    %4 = arith.addf %2, %3 : vector<1x16xf32>
    %c0_5 = arith.constant 0 : index
    %c0_6 = arith.constant 0 : index
    %5 = vector.load %arg3[%c0_5, %c0_6] : memref<1x16xf32, #tpu.memory_space<vmem>>, vector<1x16xf32>
    tpu.vector_store %arg3[%c0_5, %c0_6], %4 {strides = array<i32>} : memref<1x16xf32, #tpu.memory_space<vmem>>, vector<1x16xf32>,
    return
  }
}

</mosaic_0001>

<llo_original>
// kernel: linear_pallas.1
$region0: #{linear_pallas.1}
  #allocation0 [shape = 'u32[]', space=smem, size = 0x4, offset = 0x4, fixed_abs, tag = 'smem constant byte address 0x4 - core index']
  #allocation1 [shape = 'u32[144,128]{1,0:T(1,128)}', space=vmem, size = 0x12000, scoped, tag = 'internal scratch']
  %s0 = inlined_call_operand.vmem [shape: f32[1,48], index: 0, kind: input, shape index: {}]
  %s1 = inlined_call_operand.vmem [shape: f32[48,16], index: 1, kind: input, shape index: {}]
  %s2 = inlined_call_operand.vmem [shape: f32[1,16], index: 2, kind: input, shape index: {}]
  %s3 = inlined_call_operand.hbm [shape: f32[1,16], index: 3, kind: output, shape index: {}]
  %s4 = sld [smem:[#allocation0]]
  $region22: #{linear_pallas.1} parent=0
    _
  %s6 = ssub.s32 1, %s4
  %s7 = scalar_select 0, %s6, %s4
  $region1: #{linear_pallas.1} parent=0
    #allocation2 [shape = 'u8[512]{0}', space=vmem, size = 0x400, scoped, tag = 'output window, operand 0, single buffered']
    #allocation3 [shape = 's32[1]{0}', space=sflag, size = 0x4, scoped, tag = 'scoped memory for linear_pallas.1']
    %8 = vsyncpa [#allocation3], 0
    // Predicated region
    $region2: #{linear_pallas.1} parent=1 // pred_check
      _
    $region3: #{linear_pallas.1} parent=1 // pred_check_branch
      %10 = sbr.rel (0) target = $region5
    $region4: #{linear_pallas.1} parent=1 // pred_region
      _
    $region5: #{linear_pallas.1} parent=1 // pred_fallthru
      _
    // Predicated region
    $region6: #{linear_pallas.1} parent=1 // pred_check
      _
    $region7: #{linear_pallas.1} parent=1 // pred_check_branch
      %12 = sbr.rel (0) target = $region9
    $region8: #{linear_pallas.1} parent=1 // pred_region
      _
    $region9: #{linear_pallas.1} parent=1 // pred_fallthru
      _
    // Predicated region
    $region10: #{linear_pallas.1} parent=1 // pred_check
      _
    $region11: #{linear_pallas.1} parent=1 // pred_check_branch
      %14 = sbr.rel (0) target = $region13
    $region12: #{linear_pallas.1} parent=1 // pred_region
      _
    $region13: #{linear_pallas.1} parent=1 // pred_fallthru
      _
    %v15 = vld [vmem:[%s0] sm:$0x1]
    %v16 = vld [vmem:[%s1] sm:$0xff]
    %v17 = vld [vmem:[%s1 + $0x8] sm:$0xff]
    %v18 = vld [vmem:[%s1 + $0x10] sm:$0xff]
    %v19 = vld [vmem:[%s1 + $0x18] sm:$0xff]
    %v20 = vld [vmem:[%s1 + $0x20] sm:$0xff]
    %v21 = vld [vmem:[%s1 + $0x28] sm:$0xff]
    %v22 = vld [vmem:[%s2] sm:$0x1]
    %vm23 = vcmask 392192
    %v25 = vsel %vm23, %v15, 0
    %27 = vmatprep.subr.mxu0 0.0
    %28 = vmatpush1.msra.mxu0 %v16
    %29 = vmatprep.subr.mxu0 0.0
    %30 = vmatpush1.msra.mxu0 %v17
    %31 = vmatprep.subr.mxu0 0.0
    %32 = vmatpush1.msra.mxu0 %v18
    %33 = vmatprep.subr.mxu0 0.0
    %34 = vmatpush1.msra.mxu0 %v19
    %35 = vmatprep.subr.mxu0 0.0
    %36 = vmatpush1.msra.mxu0 %v20
    %37 = vmatprep.subr.mxu0 0.0
    %38 = vmatpush1.msra.mxu0 %v21
    %39 = vmatprep.subr.mxu0 0.0
    %40 = vmatpush1.msra.mxu0 0.0
    %41 = vmatprep.subr.mxu0 0.0
    %42 = vmatpush1.msra.mxu0 0.0
    %43 = vmatprep.subr.mxu0 0.0
    %44 = vmatpush1.msra.mxu0 0.0
    %45 = vmatprep.subr.mxu0 0.0
    %46 = vmatpush1.msra.mxu0 0.0
    %47 = vmatprep.subr.mxu0 0.0
    %48 = vmatpush1.msra.mxu0 0.0
    %49 = vmatprep.subr.mxu0 0.0
    %50 = vmatpush1.msra.mxu0 0.0
    %51 = vmatprep.subr.mxu0 0.0
    %52 = vmatpush1.msra.mxu0 0.0
    %53 = vmatprep.subr.mxu0 0.0
    %54 = vmatpush1.msra.mxu0 0.0
    %55 = vmatprep.subr.mxu0 0.0
    %56 = vmatpush1.msra.mxu0 0.0
    %57 = vmatprep.subr.mxu0 0.0
    %58 = vmatpush1.msra.mxu0 0.0
    %59 = vmatprep.subr.mxu0 0.0
    %60 = vmatpush1.msra.mxu0 0.0
    %61 = vmatprep.subr.mxu0 0.0
    %62 = vmatpush1.msra.mxu0 0.0
    %63 = vmatprep.subr.mxu0 0.0
    %64 = vmatpush1.msra.mxu0 0.0
    %65 = vmatprep.subr.mxu0 0.0
    %66 = vmatpush1.msra.mxu0 0.0
    %67 = vmatprep.subr.mxu0 0.0
    %68 = vmatpush1.msra.mxu0 0.0
    %69 = vmatprep.subr.mxu0 0.0
    %70 = vmatpush1.msra.mxu0 0.0
    %71 = vmatprep.subr.mxu0 0.0
    %72 = vmatpush1.msra.mxu0 0.0
    %73 = vmatprep.subr.mxu0 0.0
    %74 = vmatpush1.msra.mxu0 0.0
    %75 = vmatprep.subr.mxu0 0.0
    %76 = vmatpush1.msra.mxu0 0.0
    %77 = vmatprep.subr.mxu0 0.0
    %78 = vmatpush1.msra.mxu0 0.0
    %79 = vmatprep.subr.mxu0 0.0
    %80 = vmatpush1.msra.mxu0 0.0
    %81 = vmatprep.subr.mxu0 0.0
    %82 = vmatpush1.msra.mxu0 0.0
    %83 = vmatprep.subr.mxu0 0.0
    %84 = vmatpush1.msra.mxu0 0.0
    %85 = vmatprep.subr.mxu0 0.0
    %86 = vmatpush1.msra.mxu0 0.0
    %87 = vmatprep.subr.mxu0 0.0
    %88 = vmatpush1.msra.mxu0 0.0
    %89 = vmatprep.subr.mxu0 0.0
    %90 = vmatpush1.msra.mxu0 0.0
    %91 = vmatprep.mubr.f32.mxu0 0.0
    %92 = vmatmul.mubr.f32.gmra.mrb[0].mxu0 %v25
    %v93 = vpop.f32.mrb[0].mxu0
    %v94 = vadd.f32 %v22, %v93
    %v95 = vpop.f32.mrb[0].mxu0
    %96 = vdwg.mxu0
    %vm97 = vcmask 122880
    %98 = vst.msk [vmem:[#allocation2] sm:$0x1] %vm97, %v94
    // Predicated region
    $region14: #{linear_pallas.1} parent=1 // pred_check
      _
    $region15: #{linear_pallas.1} parent=1 // pred_check_branch
      %100 = sbr.rel (0) target = $region17
    $region16: #{linear_pallas.1} parent=1 // pred_region
      %s102 = ssub.s32 16, 16
      %103 = vsyncadd [#allocation3], %s102
      %s105 = sshll.u32 [#allocation2], 4
      %s106 = int_to_ptr.vmem [resolvable:$true] %s105
      %108 = dma.vmem_to_hbm [thread:$0]  %s106, 16, %s3, [#allocation3]
    $region17: #{linear_pallas.1} parent=1 // pred_fallthru
      _
    // Predicated region
    $region18: #{linear_pallas.1} parent=1 // pred_check
      _
    $region19: #{linear_pallas.1} parent=1 // pred_check_branch
      %110 = sbr.rel (0) target = $region21
    $region20: #{linear_pallas.1} parent=1 // pred_region
      %111 = dma.done [#allocation3], 16
    $region21: #{linear_pallas.1} parent=1 // pred_fallthru
      _
    %112 = vsyncpa [#allocation3], 1

</llo_original>
